<compile_context>
chip_gen: v7x
topology: tpu7x:2x2x1
jax: 0.10.0
libtpu: 0.0.40
codegen_flags: <defaults>
</compile_context>

<pallas_src>
import functools

import jax
import jax.numpy as jnp
from jax import lax
from jax.experimental import pallas as pl
from jax.experimental.pallas import tpu as pltpu


# ---------------------------------------------------------------------------
# Kernels
# ---------------------------------------------------------------------------
def _stats_kernel(x_ref, g_ref, m_ref, *, compute_dtype):
    """Pass 1: per-batch input statistics, reduced over spatial tiles.

    x_ref : (1, C, TL)  channel-major input tile
    g_ref : (1, C, C)   Gram accumulator  G = X^T X  (f32; VMEM-resident across
                        the l axis because its index_map ignores l)
    m_ref : (1, C, 1)   column sums       m = X^T 1  (f32)
    """
    l_idx = pl.program_id(1)

    @pl.when(l_idx == 0)
    def _():
        g_ref[...] = jnp.zeros_like(g_ref)
        m_ref[...] = jnp.zeros_like(m_ref)

    x = x_ref[0]                                              # (C, TL)
    xc = x.astype(compute_dtype)
    # Gram over the lane (spatial) dim: contract dim 1 of both operands,
    # no transpose materialized, f32 accumulation on the MXU.
    g_ref[0] += lax.dot_general(xc, xc, (((1,), (1,)), ((), ())),
                                preferred_element_type=jnp.float32)
    m_ref[0] += jnp.sum(x.astype(jnp.float32), axis=1, keepdims=True)


def _apply_kernel(x_ref, wct_ref, bc_ref, o_ref):
    """Pass 2: out_tile = Wc[n]^T @ x_tile + bc[n]  (single streaming GEMM).

    x_ref  : (1, C, TL) input tile          o_ref : (1, C, TL) output tile
    wct_ref: (1, C, C)  per-batch combined weight (compute dtype)
    bc_ref : (1, C, 1)  per-batch combined bias   (f32)
    """
    x = x_ref[0].astype(wct_ref.dtype)                        # (C, TL)
    out = jnp.dot(wct_ref[0], x, preferred_element_type=jnp.float32)
    out = out + bc_ref[0]                                     # (C,1) lane-bcast
    o_ref[0] = out.astype(o_ref.dtype)


# ---------------------------------------------------------------------------
# Wrapper helpers
# ---------------------------------------------------------------------------
def _vmem_capacity_bytes():
    try:
        return int(pltpu.get_tpu_info().vmem_capacity_bytes)
    except Exception:
        return 64 * 1024 * 1024            # conservative fallback (v7x per-TC)


def _choose_spatial_tile(L, target, C, itemsize, budget_bytes):
    """Pick (TL, Lp): TL is a multiple of 128 dividing the (possibly padded)
    spatial length Lp, clamped so double-buffered x/out tiles fit the budget."""
    # 2 pipeline buffers each for the (C, TL) input and output tiles.
    vmem_cap = max(128, (budget_bytes // max(1, 4 * C * itemsize)) // 128 * 128)
    target = max(128, (min(target, vmem_cap) // 128) * 128)

    # Prefer an exact multiple-of-128 divisor of L (no padding needed).
    t = min(target, (L // 128) * 128)
    while t >= 128:
        if L % t == 0:
            return t, L
        t -= 128

    # Otherwise pad L up to a multiple of 128 and tile the padded length.
    Lp = ((L + 127) // 128) * 128
    t = min(target, Lp)
    while Lp % t != 0:
        t -= 128
    return t, Lp


# ---------------------------------------------------------------------------
# Public entry point
# ---------------------------------------------------------------------------
def relation_nonlocal(x_nchw, params, *, compute_dtype=jnp.bfloat16,
                      tl_target=None):
    """params = ((w0,b0),(w1,b1),(w2,b2),(w3,b3)); wK: (C,C) (out,in), bK: (C,)."""
    N, C, H, W = x_nchw.shape
    L = H * W
    cdt = jnp.dtype(compute_dtype)

    # Channel-major spatial flattening: NCHW -> (N, C, L) is a pure reshape
    # (no transpose, no extra HBM pass).
    x = x_nchw.reshape(N, C, L)

    cap = _vmem_capacity_bytes()
    vmem_limit = int(min(cap * 3 // 4, 112 * 1024 * 1024))   # ~48 MiB v7x, ~96 MiB v5e/v6e
    if tl_target is None:
        tl_target = 2048 if cap >= 96 * 1024 * 1024 else 1024
    TL, Lp = _choose_spatial_tile(L, tl_target, C, x.dtype.itemsize,
                                  budget_bytes=cap // 2)
    if Lp != L:
        x = jnp.pad(x, ((0, 0), (0, 0), (0, Lp - L)))        # zeros don't affect G/m
    num_l = Lp // TL

    x_spec = pl.BlockSpec((1, C, TL), lambda n, l: (n, 0, l))
    g_spec = pl.BlockSpec((1, C, C), lambda n, l: (n, 0, 0))
    m_spec = pl.BlockSpec((1, C, 1), lambda n, l: (n, 0, 0))

    x_bytes = N * C * Lp * x.dtype.itemsize
    gm_bytes = N * C * (C + 1) * 4

    # ---- Pass 1: per-batch statistics G = X^T X, m = X^T 1 -----------------
    g, m = pl.pallas_call(
        functools.partial(_stats_kernel, compute_dtype=cdt),
        out_shape=(jax.ShapeDtypeStruct((N, C, C), jnp.float32),
                   jax.ShapeDtypeStruct((N, C, 1), jnp.float32)),
        grid=(N, num_l),
        in_specs=[x_spec],
        out_specs=(g_spec, m_spec),
        compiler_params=pltpu.CompilerParams(
            dimension_semantics=("parallel", "arbitrary"),
            vmem_limit_bytes=vmem_limit),
        cost_estimate=pl.CostEstimate(flops=2 * N * C * C * Lp,
                                      transcendentals=0,
                                      bytes_accessed=x_bytes + gm_bytes),
    )(x)

    # ---- Tiny per-batch combine (O(N*C^3), plain JAX, f32) -----------------
    #   kv = f_k^T f_v = w1 G w0^T + (w1 m) b0^T + b1 (w0 m)^T + L b1 b0^T
    #   S  = kv / L
    #   out = X Wc + bc  with  Wc = w2^T S w3^T,  bc = b2 S w3^T + b3
    #   (channel-major pass 2 uses Wc^T = w3 S^T w2 and bc as a column)
    (w0, b0), (w1, b1), (w2, b2), (w3, b3) = [
        (w.astype(jnp.float32), b.astype(jnp.float32)) for (w, b) in params]
    mv = m[..., 0]                                            # (N, C)
    hi = lax.Precision.HIGHEST
    kv = jnp.einsum('ab,nbc,dc->nad', w1, g, w0, precision=hi)
    kv = kv + (jnp.einsum('ab,nb->na', w1, mv, precision=hi)[:, :, None]
               * b0[None, None, :])
    kv = kv + (b1[None, :, None]
               * jnp.einsum('ab,nb->na', w0, mv, precision=hi)[:, None, :])
    kv = kv + float(L) * (b1[:, None] * b0[None, :])[None]
    s_t = jnp.swapaxes(kv, 1, 2) * (1.0 / float(L))           # S^T  (N, C, C)
    wct = jnp.einsum('ab,nbc,cd->nad', w3, s_t, w2, precision=hi)          # Wc^T
    bc = jnp.einsum('ab,nbc,c->na', w3, s_t, b2, precision=hi) + b3[None]  # (N, C)
    wct = wct.astype(cdt)
    bc = bc[:, :, None].astype(jnp.float32)                   # (N, C, 1)

    wct_spec = pl.BlockSpec((1, C, C), lambda n, l: (n, 0, 0))
    bc_spec = pl.BlockSpec((1, C, 1), lambda n, l: (n, 0, 0))

    # ---- Pass 2: out = Wc^T @ x + bc  (lane-dense channel-major stores) ----
    out = pl.pallas_call(
        _apply_kernel,
        out_shape=jax.ShapeDtypeStruct((N, C, Lp), x_nchw.dtype),
        grid=(N, num_l),
        in_specs=[x_spec, wct_spec, bc_spec],
        out_specs=x_spec,
        compiler_params=pltpu.CompilerParams(
            dimension_semantics=("parallel", "parallel"),
            vmem_limit_bytes=vmem_limit),
        cost_estimate=pl.CostEstimate(flops=2 * N * C * C * Lp,
                                      transcendentals=0,
                                      bytes_accessed=2 * x_bytes + gm_bytes),
    )(x, wct, bc)

    if Lp != L:
        out = out[:, :, :L]
    return out.reshape(N, C, H, W)


# ---------------------------------------------------------------------------
# Plain-JAX reference (mirrors the PyTorch forward exactly, NCHW)
# ---------------------------------------------------------------------------
def reference_forward(x_nchw, params):
    N, C, H, W = x_nchw.shape

    def conv1x1(z, w, b):
        return jnp.einsum("nchw,oc->nohw", z, w) + b[None, :, None, None]

    (w0, b0), (w1, b1), (w2, b2), (w3, b3) = params
    f_v = jnp.transpose(conv1x1(x_nchw, w0, b0), (0, 2, 3, 1)).reshape(N, H * W, C)
    f_k = jnp.transpose(conv1x1(x_nchw, w1, b1), (0, 2, 3, 1)).reshape(N, H * W, C)
    f_q = jnp.transpose(conv1x1(x_nchw, w2, b2), (0, 2, 3, 1)).reshape(N, H * W, C)
    f_q = jnp.transpose(f_q, (0, 2, 1))                       # (N, C, HW)
    w = jnp.matmul(f_k, f_q) / (H * W)                        # (N, HW, HW)
    f_r = jnp.matmul(jnp.transpose(w, (0, 2, 1)), f_v)        # (N, HW, C)
    f_r = f_r.reshape(N, H, W, C)
    f_r = jnp.transpose(f_r, (0, 3, 1, 2))                    # NCHW
    return conv1x1(f_r, w3, b3)


def init_params(key, C):
    """Deterministic synthetic params: 4 x (Conv2d(C, C, 1) weight+bias)."""
    keys = jax.random.split(key, 8)
    bound = 1.0 / jnp.sqrt(C)  # PyTorch Conv2d default init range
    params = []
    for i in range(4):
        w = jax.random.uniform(keys[2 * i], (C, C), jnp.float32, -bound, bound)
        b = jax.random.uniform(keys[2 * i + 1], (C,), jnp.float32, -bound, bound)
        params.append((w, b))
    return tuple(params)


if __name__ == "__main__":
    key = jax.random.PRNGKey(0)
    k_x, k_p = jax.random.split(key)

    N, C, H, W = 2, 4, 16, 16
    x = jax.random.normal(k_x, (N, C, H, W), dtype=jnp.float32)
    params = init_params(k_p, C)

    ref = jax.block_until_ready(reference_forward(x, params))

    # f32 MXU path, tight tolerance.  tl_target=128 -> 2 spatial tiles per
    # batch element so the cross-tile G/m accumulation path is exercised.
    out_f32 = jax.block_until_ready(
        relation_nonlocal(x, params, compute_dtype=jnp.float32, tl_target=128))
    assert out_f32.shape == (N, C, H, W), out_f32.shape
    assert jnp.allclose(out_f32, ref, atol=1e-4, rtol=1e-4), float(
        jnp.max(jnp.abs(out_f32 - ref)))

    # Default production path: bf16 matmul operands with f32 accumulation.
    out_bf16 = jax.block_until_ready(
        relation_nonlocal(x, params, tl_target=128))
    assert jnp.allclose(out_bf16, ref, atol=5e-2, rtol=5e-2), float(
        jnp.max(jnp.abs(out_bf16 - ref)))

    print("KERNEL_OK")
</pallas_src>

<mosaic_0001>
module attributes {stable_mosaic.version = 11 : i64} {
  func.func @_stats_kernel(%arg0: i32, %arg1: i32, %arg2: memref<1x4x128xf32, #tpu.memory_space<vmem>>, %arg3: memref<1x4x4xf32, #tpu.memory_space<vmem>>, %arg4: memref<1x4x1xf32, #tpu.memory_space<vmem>>) attributes {dimension_semantics = [#tpu.dimension_semantics<parallel>, #tpu.dimension_semantics<arbitrary>], iteration_bounds = array<i64: 2, 2>, scalar_prefetch = 0 : i64, scratch_operands = 0 : i64, tpu.core_type = #tpu.core_type<tc>, window_params = [{transform_indices = @transform_0, window_bounds = array<i64: 1, 4, 128>}, {transform_indices = @transform_1, window_bounds = array<i64: 1, 4, 4>}, {transform_indices = @transform_2, window_bounds = array<i64: 1, 4, 1>}]} {
    %c0_i32 = arith.constant 0 : i32
    %0 = arith.cmpi eq, %arg1, %c0_i32 : i32
    %1 = arith.extui %0 : i1 to i32
    %c0_i32_0 = arith.constant 0 : i32
    %2 = arith.cmpi ne, %1, %c0_i32_0 : i32
    scf.if %2 {
      %cst_16 = arith.constant 0.000000e+00 : f32
      %20 = vector.broadcast %cst_16 : f32 to vector<1x4x4xf32>
      %c0_17 = arith.constant 0 : index
      %c0_18 = arith.constant 0 : index
      %c0_19 = arith.constant 0 : index
      %21 = vector.load %arg3[%c0_17, %c0_18, %c0_19] : memref<1x4x4xf32, #tpu.memory_space<vmem>>, vector<1x4x4xf32>
      tpu.vector_store %arg3[%c0_17, %c0_18, %c0_19], %20 {strides = array<i32>} : memref<1x4x4xf32, #tpu.memory_space<vmem>>, vector<1x4x4xf32>,
      %cst_20 = arith.constant 0.000000e+00 : f32
      %22 = vector.broadcast %cst_20 : f32 to vector<1x4x1xf32>
      %c0_21 = arith.constant 0 : index
      %c0_22 = arith.constant 0 : index
      %c0_23 = arith.constant 0 : index
      %23 = vector.load %arg4[%c0_21, %c0_22, %c0_23] : memref<1x4x1xf32, #tpu.memory_space<vmem>>, vector<1x4x1xf32>
      tpu.vector_store %arg4[%c0_21, %c0_22, %c0_23], %22 {strides = array<i32>} : memref<1x4x1xf32, #tpu.memory_space<vmem>>, vector<1x4x1xf32>,
    } else {
    }
    %c0 = arith.constant 0 : index
    %c0_1 = arith.constant 0 : index
    %c0_2 = arith.constant 0 : index
    %3 = vector.load %arg2[%c0, %c0_1, %c0_2] : memref<1x4x128xf32, #tpu.memory_space<vmem>>, vector<1x4x128xf32>
    %4 = vector.shape_cast %3 : vector<1x4x128xf32> to vector<4x128xf32>
    %c0_3 = arith.constant 0 : index
    %c0_4 = arith.constant 0 : index
    %c0_5 = arith.constant 0 : index
    %5 = vector.load %arg3[%c0_3, %c0_4, %c0_5] : memref<1x4x4xf32, #tpu.memory_space<vmem>>, vector<1x4x4xf32>
    %6 = vector.shape_cast %5 : vector<1x4x4xf32> to vector<4x4xf32>
    %cst = arith.constant dense<0.000000e+00> : vector<4x4xf32>
    %7 = tpu.matmul %4, %4, %cst {dimension_numbers = #tpu.dot_dimension_numbers<[1], [1], [0], [0], [0, 0, 1, 0], [], []>} : vector<4x128xf32>, vector<4x128xf32>, vector<4x4xf32> -> vector<4x4xf32>
    %8 = arith.addf %6, %7 : vector<4x4xf32>
    %c0_6 = arith.constant 0 : index
    %c0_7 = arith.constant 0 : index
    %c0_8 = arith.constant 0 : index
    %9 = vector.load %arg3[%c0_6, %c0_7, %c0_8] : memref<1x4x4xf32, #tpu.memory_space<vmem>>, vector<1x4x4xf32>
    %10 = vector.shape_cast %9 : vector<1x4x4xf32> to vector<4x4xf32>
    %11 = vector.shape_cast %8 : vector<4x4xf32> to vector<1x4x4xf32>
    tpu.vector_store %arg3[%c0_6, %c0_7, %c0_8], %11 {strides = array<i32>} : memref<1x4x4xf32, #tpu.memory_space<vmem>>, vector<1x4x4xf32>,
    %c0_9 = arith.constant 0 : index
    %c0_10 = arith.constant 0 : index
    %c0_11 = arith.constant 0 : index
    %12 = vector.load %arg4[%c0_9, %c0_10, %c0_11] : memref<1x4x1xf32, #tpu.memory_space<vmem>>, vector<1x4x1xf32>
    %13 = vector.shape_cast %12 : vector<1x4x1xf32> to vector<4x1xf32>
    %cst_12 = arith.constant dense<0.000000e+00> : vector<4xf32>
    %14 = vector.multi_reduction <add>, %4, %cst_12 [1] : vector<4x128xf32> to vector<4xf32>
    %15 = vector.shape_cast %14 : vector<4xf32> to vector<4x1xf32>
    %16 = arith.addf %13, %15 : vector<4x1xf32>
    %c0_13 = arith.constant 0 : index
    %c0_14 = arith.constant 0 : index
    %c0_15 = arith.constant 0 : index
    %17 = vector.load %arg4[%c0_13, %c0_14, %c0_15] : memref<1x4x1xf32, #tpu.memory_space<vmem>>, vector<1x4x1xf32>
    %18 = vector.shape_cast %17 : vector<1x4x1xf32> to vector<4x1xf32>
    %19 = vector.shape_cast %16 : vector<4x1xf32> to vector<1x4x1xf32>
    tpu.vector_store %arg4[%c0_13, %c0_14, %c0_15], %19 {strides = array<i32>} : memref<1x4x1xf32, #tpu.memory_space<vmem>>, vector<1x4x1xf32>,
    return
  }
  func.func @transform_0(%arg0: i32, %arg1: i32) -> (i32, i32, i32) {
    %c0_i32 = arith.constant 0 : i32
    %c0_i32_0 = arith.constant 0 : i32
    return %arg0, %c0_i32, %arg1 : i32, i32, i32
  }
  func.func @transform_1(%arg0: i32, %arg1: i32) -> (i32, i32, i32) {
    %c0_i32 = arith.constant 0 : i32
    %c0_i32_0 = arith.constant 0 : i32
    %c0_i32_1 = arith.constant 0 : i32
    return %arg0, %c0_i32, %c0_i32_0 : i32, i32, i32
  }
  func.func @transform_2(%arg0: i32, %arg1: i32) -> (i32, i32, i32) {
    %c0_i32 = arith.constant 0 : i32
    %c0_i32_0 = arith.constant 0 : i32
    %c0_i32_1 = arith.constant 0 : i32
    return %arg0, %c0_i32, %c0_i32_0 : i32, i32, i32
  }
}

</mosaic_0001>

<llo_original>
// kernel: tpu_custom_call.1
$region0: #{tpu_custom_call.1}
  #allocation0 [shape = 'u32[]', space=smem, size = 0x4, offset = 0x4, fixed_abs, tag = 'smem constant byte address 0x4 - core index']
  #allocation1 [shape = 'u32[144,128]{1,0:T(1,128)}', space=vmem, size = 0x12000, scoped, tag = 'internal scratch']
  %s0 = inlined_call_operand.hbm [shape: f32[2,4,256], index: 0, kind: input, shape index: {}]
  %s1 = inlined_call_operand.hbm [shape: f32[2,4,4], index: 1, kind: output, shape index: {0}]
  %s2 = inlined_call_operand.vmem [shape: f32[2,4,1], index: 2, kind: output, shape index: {1}]
  %3 = xla_tuple %s1, %s2
  %s4 = sld [smem:[#allocation0]]
  $region53: #{tpu_custom_call.1} parent=0
    _
  %s6 = ssub.s32 1, %s4
  %s7 = scalar_select 0, %s6, %s4
  $region1: #{tpu_custom_call.1} parent=0
    #allocation2 [shape = 'u8[4096]{0}', space=vmem, size = 0x1000, scoped, tag = 'input window, operand 0']
    #allocation3 [shape = 's32[2]{0}', space=sflag, size = 0x8, scoped, tag = 'scoped memory for tpu_custom_call.1']
    #allocation4 [shape = 's32[2]{0}', space=sflag, size = 0x8, scoped, tag = 'scoped memory for tpu_custom_call.1']
    #allocation5 [shape = 'u8[4096]{0}', space=vmem, size = 0x1000, scoped, tag = 'output window, operand 0']
    %8 = vsyncpa [#allocation3], 0
    %s9 = scalar_lea.sflag [#allocation3], 1
    %10 = vsyncpa %s9, 0
    %11 = vsyncpa [#allocation4], 0
    %s12 = scalar_lea.sflag [#allocation4], 1
    %13 = vsyncpa %s12, 0
    loop: start=0, step=1, limit=6
    $region2: #{tpu_custom_call.1} parent=1 // loop_pre_header
      _
    $region3: #{tpu_custom_call.1} parent=1 // loop_header
      %s15 = sphi 0, %s19
      %p16 = scmp.ge.s32.totalorder %s15, 6
      %s22 = sphi 0, %s34
      %s23 = sphi 0, %s30
      %s24 = sphi 0, %s22
      %s25 = sphi 0, %s23
      %s26 = sphi 0, %s24
      %s27 = sphi 0, %s25
      %s39 = sphi 0, %s41
      %s42 = sphi 0, %s39
      %s43 = sphi 0, %s42
      %s59 = sphi 0, %s43
      %s65 = sphi 0, %s67
      %s68 = sphi 0, %s65
      %s69 = sphi 0, %s68
      %s85 = sphi 0, %s69
      %s91 = sphi 0, %s93
      %s94 = sphi 0, %s91
      %s95 = sphi 0, %s94
      %s111 = sphi 0, %s95
    $region4: #{tpu_custom_call.1} parent=1 // loop_header_branch
      %18 = sbr.rel (%p16) target = $region8
    $region5: #{tpu_custom_call.1} parent=1 // loop_body
      %s20 = ssub.s32 %s15, 1
      %s21 = ssub.s32 %s15, 2
      %s28 = sadd.s32 1, %s23
      %p29 = scmp.ge.s32.totalorder %s28, 2
      %s30 = scalar_select %p29, 0, %s28
      %s31 = sadd.s32 1, %s22
      %s32 = scalar_select %p29, %s31, %s22
      %p33 = scmp.ge.s32.totalorder %s32, 2
      %s34 = scalar_select %p33, 0, %s32
      %s35 = ssub.s32 %s22, %s34
      %s36 = ssub.s32 %s23, %s30
      %s37 = sor.u32 %s35, %s36
      %p38 = scmp.eq.s32.totalorder %s37, 0
      %s40 = sadd.s32 %s39, 1
      %s41 = scalar_select %p38, %s39, %s40
      %p44 = pneg %p38
      %p45 = scmp.eq.s32.totalorder %s15, 3
      %p46 = por %p44, %p45
      %p47 = scmp.ne.s32.totalorder %s39, %s42
      %p48 = scmp.eq.s32.totalorder %s15, 0
      %p49 = por %p47, %p48
      %p50 = scmp.ne.s32.totalorder %s39, %s42
      %p51 = scmp.eq.s32.totalorder %s20, 3
      %p52 = por %p50, %p51
      %p53 = scmp.ne.s32.totalorder %s42, %s43
      %p54 = scmp.eq.s32.totalorder %s20, 0
      %p55 = por %p53, %p54
      %p56 = scmp.ne.s32.totalorder %s42, %s43
      %p57 = scmp.eq.s32.totalorder %s21, 3
      %p58 = por %p56, %p57
      %p60 = scmp.ne.s32.totalorder %s43, %s59
      %p61 = scmp.eq.s32.totalorder %s21, 0
      %p62 = por %p60, %p61
      %s63 = ssub.s32 %s22, %s34
      %p64 = scmp.eq.s32.totalorder %s63, 0
      %s66 = sadd.s32 %s65, 1
      %s67 = scalar_select %p64, %s65, %s66
      %p70 = pneg %p64
      %p71 = scmp.eq.s32.totalorder %s15, 3
      %p72 = por %p70, %p71
      %p73 = scmp.ne.s32.totalorder %s65, %s68
      %p74 = scmp.eq.s32.totalorder %s15, 0
      %p75 = por %p73, %p74
      %p76 = scmp.ne.s32.totalorder %s65, %s68
      %p77 = scmp.eq.s32.totalorder %s20, 3
      %p78 = por %p76, %p77
      %p79 = scmp.ne.s32.totalorder %s68, %s69
      %p80 = scmp.eq.s32.totalorder %s20, 0
      %p81 = por %p79, %p80
      %p82 = scmp.ne.s32.totalorder %s68, %s69
      %p83 = scmp.eq.s32.totalorder %s21, 3
      %p84 = por %p82, %p83
      %p86 = scmp.ne.s32.totalorder %s69, %s85
      %p87 = scmp.eq.s32.totalorder %s21, 0
      %p88 = por %p86, %p87
      %s89 = ssub.s32 %s22, %s34
      %p90 = scmp.eq.s32.totalorder %s89, 0
      %s92 = sadd.s32 %s91, 1
      %s93 = scalar_select %p90, %s91, %s92
      %p96 = pneg %p90
      %p97 = scmp.eq.s32.totalorder %s15, 3
      %p98 = por %p96, %p97
      %p99 = scmp.ne.s32.totalorder %s91, %s94
      %p100 = scmp.eq.s32.totalorder %s15, 0
      %p101 = por %p99, %p100
      %p102 = scmp.ne.s32.totalorder %s91, %s94
      %p103 = scmp.eq.s32.totalorder %s20, 3
      %p104 = por %p102, %p103
      %p105 = scmp.ne.s32.totalorder %s94, %s95
      %p106 = scmp.eq.s32.totalorder %s20, 0
      %p107 = por %p105, %p106
      %p108 = scmp.ne.s32.totalorder %s94, %s95
      %p109 = scmp.eq.s32.totalorder %s21, 3
      %p110 = por %p108, %p109
      %p112 = scmp.ne.s32.totalorder %s95, %s111
      %p113 = scmp.eq.s32.totalorder %s21, 0
      %p114 = por %p112, %p113
      %p115 = scmp.le.s32.totalorder 1, %s15
      %p116 = scmp.lt.s32.totalorder %s15, 5
      %p117 = pnand %p115, %p116
      %p118 = pneg %p117
      // Predicated region
      $region9: #{tpu_custom_call.1} parent=5 // pred_check
        _
      $region10: #{tpu_custom_call.1} parent=5 // pred_check_branch
        %120 = sbr.rel (%p117) target = $region12
      $region11: #{tpu_custom_call.1} parent=5 // pred_region
        %s121 = ssub.s32 %s15, 1
      $region12: #{tpu_custom_call.1} parent=5 // pred_fallthru
        _
      %p122 = scmp.lt.s32.totalorder %s15, 4
      // Predicated region
      $region13: #{tpu_custom_call.1} parent=5 // pred_check
        %p123 = pneg %p122
      $region14: #{tpu_custom_call.1} parent=5 // pred_check_branch
        %125 = sbr.rel (%p123) target = $region16
      $region15: #{tpu_custom_call.1} parent=5 // pred_region
        // Predicated region
        $region17: #{tpu_custom_call.1} parent=15 // pred_check
          %p126 = pneg %p49
        $region18: #{tpu_custom_call.1} parent=15 // pred_check_branch
          %128 = sbr.rel (%p126) target = $region20
        $region19: #{tpu_custom_call.1} parent=15 // pred_region
          %s129 = sand.u32 %s39, 1
          %s130 = scalar_lea.sflag [#allocation3], %s129
          %s131 = sand.u32 %s39, 1
          %s132 = smul.addr %s131, 4
          %s133 = scalar_lea.vmem [#allocation2], %s132
          %s135 = ssub.s32 64, 64
          %136 = vsyncadd %s130, %s135
          %s137 = smul.addr %s22, 2
          %s138 = sadd.s32 %s23, %s137
          %s139 = smul.addr %s138, 64
          %s140 = scalar_lea.hbm %s0, %s139
          %s142 = sshll.u32 %s133, 4
          %s143 = int_to_ptr.vmem [resolvable:$true] %s142
          %145 = dma.hbm_to_vmem [thread:$0]  %s140, 64, %s143, %s130
        $region20: #{tpu_custom_call.1} parent=15 // pred_fallthru
          _
      $region16: #{tpu_custom_call.1} parent=5 // pred_fallthru
        _
      %p146 = scmp.le.s32.totalorder 1, %s15
      %p147 = scmp.lt.s32.totalorder %s15, 5
      %p148 = pnand %p146, %p147
      %p149 = pneg %p148
      // Predicated region
      $region21: #{tpu_custom_call.1} parent=5 // pred_check
        _
      $region22: #{tpu_custom_call.1} parent=5 // pred_check_branch
        %151 = sbr.rel (%p148) target = $region24
      $region23: #{tpu_custom_call.1} parent=5 // pred_region
        %s152 = ssub.s32 %s15, 1
        %s153 = sand.u32 %s42, 1
        %s154 = scalar_lea.sflag [#allocation3], %s153
        %s155 = sand.u32 %s42, 1
        %s156 = smul.addr %s155, 4
        %s157 = scalar_lea.vmem [#allocation2], %s156
        // Predicated region
        $region25: #{tpu_custom_call.1} parent=23 // pred_check
          %p158 = pneg %p55
        $region26: #{tpu_custom_call.1} parent=23 // pred_check_branch
          %160 = sbr.rel (%p158) target = $region28
        $region27: #{tpu_custom_call.1} parent=23 // pred_region
          %161 = dma.done %s154, 64
        $region28: #{tpu_custom_call.1} parent=23 // pred_fallthru
          _
        %s162 = sand.u32 %s42, 1
        %s163 = scalar_lea.sflag [#allocation3], %s162
        %s164 = sand.u32 %s42, 1
        %s165 = smul.addr %s164, 4
        %s166 = scalar_lea.vmem [#allocation2], %s165
        %p167 = pneg %p55
        %p168 = pneg %p52
        %p169 = pneg %p81
        %p170 = pneg %p78
        %s171 = sand.u32 %s68, 1
        %s172 = scalar_lea.sflag [#allocation4], %s171
        %s173 = sand.u32 %s68, 1
        %s174 = smul.addr %s173, 4
        %s175 = scalar_lea.vmem [#allocation5], %s174
        %p176 = pneg %p107
        %p177 = pneg %p104
        %p178 = scmp.lt.s32.totalorder %s24, 1
        %s179 = scalar_select %p178, %s24, 1
        %s180 = smul.addr %s179, 4
        %s181 = scalar_lea.vmem %s2, %s180
        %p182 = scmp.lt.s32.totalorder %s24, 1
        %s183 = scalar_select %p182, %s24, 1
        %s184 = smul.addr %s183, 4
        %s185 = scalar_lea.vmem %s2, %s184
        %p186 = scmp.eq.s32.totalorder %s25, 0
        // Predicated region
        $region29: #{tpu_custom_call.1} parent=23 // pred_check
          %p187 = pneg %p186
        $region30: #{tpu_custom_call.1} parent=23 // pred_check_branch
          %189 = sbr.rel (%p187) target = $region32
        $region31: #{tpu_custom_call.1} parent=23 // pred_region
          %vm190 = vcmask 27648
          %191 = vst.msk [vmem:[%s175] sm:$0xf] %vm190, 0.0
          %vm192 = vcmask 3072
          %193 = vst.msk [vmem:[%s185] sm:$0xf] %vm192, 0.0
        $region32: #{tpu_custom_call.1} parent=23 // pred_fallthru
          _
        %v194 = vld [vmem:[%s157] sm:$0xf]
        %v195 = vld [vmem:[%s175] sm:$0xf]
        %196 = vmatprep.subr.mxu0 0.0
        %197 = vmatpush1.xpose.msra.mxu0 %v194
        %198 = vmatprep.subr.mxu0 0.0
        %199 = vmatpush1.xpose.msra.mxu0 0.0
        %200 = vmatprep.subr.mxu0 0.0
        %201 = vmatpush1.xpose.msra.mxu0 0.0
        %202 = vmatprep.subr.mxu0 0.0
        %203 = vmatpush1.xpose.msra.mxu0 0.0
        %204 = vmatprep.subr.mxu0 0.0
        %205 = vmatpush1.xpose.msra.mxu0 0.0
        %206 = vmatprep.subr.mxu0 0.0
        %207 = vmatpush1.xpose.msra.mxu0 0.0
        %208 = vmatprep.subr.mxu0 0.0
        %209 = vmatpush1.xpose.msra.mxu0 0.0
        %210 = vmatprep.subr.mxu0 0.0
        %211 = vmatpush1.xpose.msra.mxu0 0.0
        %212 = vmatprep.subr.mxu0 0.0
        %213 = vmatpush1.xpose.msra.mxu0 0.0
        %214 = vmatprep.subr.mxu0 0.0
        %215 = vmatpush1.xpose.msra.mxu0 0.0
        %216 = vmatprep.subr.mxu0 0.0
        %217 = vmatpush1.xpose.msra.mxu0 0.0
        %218 = vmatprep.subr.mxu0 0.0
        %219 = vmatpush1.xpose.msra.mxu0 0.0
        %220 = vmatprep.subr.mxu0 0.0
        %221 = vmatpush1.xpose.msra.mxu0 0.0
        %222 = vmatprep.subr.mxu0 0.0
        %223 = vmatpush1.xpose.msra.mxu0 0.0
        %224 = vmatprep.subr.mxu0 0.0
        %225 = vmatpush1.xpose.msra.mxu0 0.0
        %226 = vmatprep.subr.mxu0 0.0
        %227 = vmatpush1.xpose.msra.mxu0 0.0
        %228 = vmatprep.subr.mxu0 0.0
        %229 = vmatpush1.xpose.msra.mxu0 0.0
        %230 = vmatprep.subr.mxu0 0.0
        %231 = vmatpush1.xpose.msra.mxu0 0.0
        %232 = vmatprep.subr.mxu0 0.0
        %233 = vmatpush1.xpose.msra.mxu0 0.0
        %234 = vmatprep.subr.mxu0 0.0
        %235 = vmatpush1.xpose.msra.mxu0 0.0
        %236 = vmatprep.subr.mxu0 0.0
        %237 = vmatpush1.xpose.msra.mxu0 0.0
        %238 = vmatprep.subr.mxu0 0.0
        %239 = vmatpush1.xpose.msra.mxu0 0.0
        %240 = vmatprep.subr.mxu0 0.0
        %241 = vmatpush1.xpose.msra.mxu0 0.0
        %242 = vmatprep.subr.mxu0 0.0
        %243 = vmatpush1.xpose.msra.mxu0 0.0
        %244 = vmatprep.subr.mxu0 0.0
        %245 = vmatpush1.xpose.msra.mxu0 0.0
        %246 = vmatprep.subr.mxu0 0.0
        %247 = vmatpush1.xpose.msra.mxu0 0.0
        %248 = vmatprep.subr.mxu0 0.0
        %249 = vmatpush1.xpose.msra.mxu0 0.0
        %250 = vmatprep.subr.mxu0 0.0
        %251 = vmatpush1.xpose.msra.mxu0 0.0
        %252 = vmatprep.subr.mxu0 0.0
        %253 = vmatpush1.xpose.msra.mxu0 0.0
        %254 = vmatprep.subr.mxu0 0.0
        %255 = vmatpush1.xpose.msra.mxu0 0.0
        %256 = vmatprep.subr.mxu0 0.0
        %257 = vmatpush1.xpose.msra.mxu0 0.0
        %258 = vmatprep.subr.mxu0 0.0
        %259 = vmatpush1.xpose.msra.mxu0 0.0
        %260 = vmatprep.mubr.f32.mxu0 0.0
        %261 = vmatmul.mubr.f32.gmra.mrb[0].mxu0 %v194
        %v262 = vpop.f32.mrb[0].mxu0
        %v263 = vadd.f32 0.0, %v262
        %v264 = vpop.f32.mrb[0].mxu0
        %265 = vdwg.mxu0
        %v266 = vadd.f32 %v195, %v263
        %vm267 = vcmask 27648
        %268 = vst.msk [vmem:[%s175] sm:$0xf] %vm267, %v266
        %v269 = vld [vmem:[%s185] sm:$0xf]
        %vm270 = vcmask 1043456
        %v271 = vsel %vm270, %v194, 0.0
        %272 = vadd.xlane.f32.xlu0 %v271
        %v273 = vpop.xlane.xlu0 %272
        %v274 = vadd.f32 %v269, %v273
        %vm275 = vcmask 3072
        %276 = vst.msk [vmem:[%s185] sm:$0xf] %vm275, %v274
        %s277 = sand.u32 %s68, 1
        %s278 = scalar_lea.sflag [#allocation4], %s277
        %s279 = sand.u32 %s68, 1
        %s280 = smul.addr %s279, 4
        %s281 = scalar_lea.vmem [#allocation5], %s280
        %p282 = scmp.lt.s32.totalorder %s24, 1
        %s283 = scalar_select %p282, %s24, 1
        %s284 = smul.addr %s283, 4
        %s285 = scalar_lea.vmem %s2, %s284
        // Predicated region
        $region33: #{tpu_custom_call.1} parent=23 // pred_check
          %p286 = pneg %p78
        $region34: #{tpu_custom_call.1} parent=23 // pred_check_branch
          %288 = sbr.rel (%p286) target = $region36
        $region35: #{tpu_custom_call.1} parent=23 // pred_region
          %s290 = ssub.s32 64, 64
          %291 = vsyncadd %s278, %s290
          %s292 = smul.addr %s24, 64
          %s293 = scalar_lea.hbm %s1, %s292
          %s295 = sshll.u32 %s281, 4
          %s296 = int_to_ptr.vmem [resolvable:$true] %s295
          %298 = dma.vmem_to_hbm [thread:$0]  %s296, 64, %s293, %s278
        $region36: #{tpu_custom_call.1} parent=23 // pred_fallthru
          _
        // Predicated region
        $region37: #{tpu_custom_call.1} parent=23 // pred_check
          %p299 = pneg %p104
        $region38: #{tpu_custom_call.1} parent=23 // pred_check_branch
          %301 = sbr.rel (%p299) target = $region40
        $region39: #{tpu_custom_call.1} parent=23 // pred_region
          _
        $region40: #{tpu_custom_call.1} parent=23 // pred_fallthru
          _
      $region24: #{tpu_custom_call.1} parent=5 // pred_fallthru
        _
      %p302 = scmp.le.s32.totalorder 2, %s15
      // Predicated region
      $region41: #{tpu_custom_call.1} parent=5 // pred_check
        %p303 = pneg %p302
      $region42: #{tpu_custom_call.1} parent=5 // pred_check_branch
        %305 = sbr.rel (%p303) target = $region44
      $region43: #{tpu_custom_call.1} parent=5 // pred_region
        %s306 = ssub.s32 %s15, 2
        // Predicated region
        $region45: #{tpu_custom_call.1} parent=43 // pred_check
          %p307 = pneg %p84
        $region46: #{tpu_custom_call.1} parent=43 // pred_check_branch
          %309 = sbr.rel (%p307) target = $region48
        $region47: #{tpu_custom_call.1} parent=43 // pred_region
          %s310 = sand.u32 %s69, 1
          %s311 = scalar_lea.sflag [#allocation4], %s310
          %s312 = sand.u32 %s69, 1
          %s313 = smul.addr %s312, 4
          %s314 = scalar_lea.vmem [#allocation5], %s313
          %315 = dma.done %s311, 64
        $region48: #{tpu_custom_call.1} parent=43 // pred_fallthru
          _
        // Predicated region
        $region49: #{tpu_custom_call.1} parent=43 // pred_check
          %p316 = pneg %p110
        $region50: #{tpu_custom_call.1} parent=43 // pred_check_branch
          %318 = sbr.rel (%p316) target = $region52
        $region51: #{tpu_custom_call.1} parent=43 // pred_region
          %p319 = scmp.lt.s32.totalorder %s26, 1
          %s320 = scalar_select %p319, %s26, 1
          %s321 = smul.addr %s320, 4
          %s322 = scalar_lea.vmem %s2, %s321
        $region52: #{tpu_custom_call.1} parent=43 // pred_fallthru
          _
      $region44: #{tpu_custom_call.1} parent=5 // pred_fallthru
        _
    $region6: #{tpu_custom_call.1} parent=1 // loop_footer
      %s19 = sadd.s32 1, %s15
    $region7: #{tpu_custom_call.1} parent=1 // loop_footer_branch
      %14 = sbr.rel target = $region3
    $region8: #{tpu_custom_call.1} parent=1 // loop_exit
      _
    %323 = vsyncpa [#allocation3], 1
    %s324 = scalar_lea.sflag [#allocation3], 1
    %325 = vsyncpa %s324, 1
    %326 = vsyncpa [#allocation4], 1
    %s327 = scalar_lea.sflag [#allocation4], 1
    %328 = vsyncpa %s327, 1

</llo_original>
